<compile_context>
chip_gen: v7x
topology: tpu7x:2x2x1
jax: 0.10.0
libtpu: 0.0.40
codegen_flags: <defaults>
</compile_context>

<pallas_src>
import functools

import jax
import jax.numpy as jnp
from jax.experimental import pallas as pl
from jax.experimental.pallas import tpu as pltpu


def _rope_kernel(x_ref, cos_ref, sin_ref, o_ref, *, d_features: int):
    """Elementwise rotary hot path.

    x_ref, o_ref : [ts, B*H, Dt]              (VMEM tile, ts = seq tile)
    cos_ref      : [ts, 1, d_features // 2]   (float32)
    sin_ref      : [ts, 1, d_features // 2]   (float32)
    """
    d2 = d_features // 2
    d_total = x_ref.shape[-1]

    x = x_ref[...]
    c = cos_ref[...]            # [ts, 1, d2], broadcast over the B*H sublane axis
    s = sin_ref[...]

    x1 = x[:, :, 0:d2].astype(jnp.float32)
    x2 = x[:, :, d2:d_features].astype(jnp.float32)

    # rotated = x_rope * cos + rotate_half(x_rope) * sin, split into halves:
    o_ref[:, :, 0:d2] = (x1 * c - x2 * s).astype(o_ref.dtype)
    o_ref[:, :, d2:d_features] = (x2 * c + x1 * s).astype(o_ref.dtype)
    if d_features < d_total:                      # static check
        o_ref[:, :, d_features:] = x[:, :, d_features:]


def _build_cache_half(seq_len: int, d_features: int, base: int):
    """Half-width caches (the module's cache repeats its first d/2 columns).

    Returns float32 cos/sin of shape [S, 1, d_features // 2].
    """
    d2 = d_features // 2
    inv_freq = 1.0 / (base ** (jnp.arange(0, d_features, 2, dtype=jnp.float32)
                               / d_features))                       # [d2]
    seq_idx = jnp.arange(seq_len, dtype=jnp.float32)                # [S]
    idx_theta = seq_idx[:, None] * inv_freq[None, :]                # [S, d2]
    cos_half = jnp.cos(idx_theta).reshape(seq_len, 1, d2)
    sin_half = jnp.sin(idx_theta).reshape(seq_len, 1, d2)
    return cos_half, sin_half


def _largest_divisor_leq(n: int, cap: int) -> int:
    cap = max(1, min(n, cap))
    for t in range(cap, 0, -1):
        if n % t == 0:
            return t
    return 1


def _pick_seq_tile(S: int, bytes_per_seq_row: int,
                   target_block_bytes: int, min_programs: int = 2) -> int:
    """Largest divisor of S whose x-block fits the byte budget; prefer >= 2 tiles."""
    cap = max(1, target_block_bytes // max(1, bytes_per_seq_row))
    tile = _largest_divisor_leq(S, cap)
    if S // tile < min_programs and S >= min_programs:
        tile = _largest_divisor_leq(S, max(1, S // min_programs))
    return tile


def rotary_positional_encoding(x, d_features: int, base: int = 10000,
                               seq_tile: int | None = None,
                               target_block_bytes: int = 2 * 1024 * 1024):
    """Apply rotary positional encoding to x: [S, B, H, D_total]."""
    S, B, H, Dt = x.shape
    assert d_features % 2 == 0 and d_features <= Dt
    d2 = d_features // 2
    BH = B * H

    cos_half, sin_half = _build_cache_half(S, d_features, base)   # f32 [S,1,d2]

    # Collapse (B, H) into one axis -> 3-D lane/sublane-friendly layout.
    x3 = x.reshape(S, BH, Dt)

    bytes_per_row = BH * Dt * x.dtype.itemsize
    if seq_tile is None:
        seq_tile = _pick_seq_tile(S, bytes_per_row, target_block_bytes)
    elif S % seq_tile != 0:
        seq_tile = _largest_divisor_leq(S, seq_tile)
    n_tiles = S // seq_tile

    kernel = functools.partial(_rope_kernel, d_features=d_features)

    out3 = pl.pallas_call(
        kernel,
        out_shape=jax.ShapeDtypeStruct((S, BH, Dt), x.dtype),
        grid_spec=pltpu.PrefetchScalarGridSpec(
            num_scalar_prefetch=0,
            grid=(n_tiles,),
            in_specs=[
                pl.BlockSpec((seq_tile, BH, Dt), lambda i: (i, 0, 0)),
                pl.BlockSpec((seq_tile, 1, d2), lambda i: (i, 0, 0)),
                pl.BlockSpec((seq_tile, 1, d2), lambda i: (i, 0, 0)),
            ],
            out_specs=pl.BlockSpec((seq_tile, BH, Dt), lambda i: (i, 0, 0)),
        ),
        compiler_params=pltpu.CompilerParams(
            dimension_semantics=("parallel",),
            vmem_limit_bytes=32 * 1024 * 1024,
        ),
    )(x3, cos_half, sin_half)

    return out3.reshape(S, B, H, Dt)


def _reference(x, d_features: int, base: int = 10000):
    """Pure-JAX port of the PyTorch forward (full-width cache) for verification."""
    S = x.shape[0]
    d2 = d_features // 2
    inv_freq = 1.0 / (base ** (jnp.arange(0, d_features, 2, dtype=jnp.float32)
                               / d_features))
    seq_idx = jnp.arange(S, dtype=jnp.float32)
    idx_theta = jnp.einsum("n,d->nd", seq_idx, inv_freq)
    idx_theta2 = jnp.concatenate([idx_theta, idx_theta], axis=1)
    cos = jnp.cos(idx_theta2)[:, None, None, :]
    sin = jnp.sin(idx_theta2)[:, None, None, :]
    x_rope, x_pass = x[..., :d_features], x[..., d_features:]
    neg_half = jnp.concatenate([-x_rope[..., d2:], x_rope[..., :d2]], axis=-1)
    x_rope = x_rope.astype(jnp.float32) * cos + neg_half.astype(jnp.float32) * sin
    return jnp.concatenate([x_rope.astype(x.dtype), x_pass], axis=-1)


if __name__ == "__main__":
    # Small shapes consistent with the module's forward:
    # x: [seq=8, batch=2, heads=2, d_total=48], rotary applied to first 32 dims.
    S, B, H, D_TOTAL = 8, 2, 2, 48
    D_FEATURES = 32

    key = jax.random.PRNGKey(0)
    x = jax.random.normal(key, (S, B, H, D_TOTAL), dtype=jnp.float32)

    out = rotary_positional_encoding(x, D_FEATURES, base=10000)
    out = jax.block_until_ready(out)

    ref = _reference(x, D_FEATURES, base=10000)
    assert out.shape == x.shape and out.dtype == x.dtype
    assert jnp.allclose(out, ref, atol=1e-5, rtol=1e-5), "mismatch vs reference"

    print("KERNEL_OK")
</pallas_src>

<mosaic_0001>
module attributes {stable_mosaic.version = 11 : i64} {
  func.func @_rope_kernel(%arg0: i32, %arg1: memref<4x4x48xf32, #tpu.memory_space<vmem>>, %arg2: memref<4x1x16xf32, #tpu.memory_space<vmem>>, %arg3: memref<4x1x16xf32, #tpu.memory_space<vmem>>, %arg4: memref<4x4x48xf32, #tpu.memory_space<vmem>>) attributes {dimension_semantics = [#tpu.dimension_semantics<parallel>], iteration_bounds = array<i64: 2>, scalar_prefetch = 0 : i64, scratch_operands = 0 : i64, tpu.core_type = #tpu.core_type<tc>, window_params = [{transform_indices = @transform_0, window_bounds = array<i64: 4, 4, 48>}, {transform_indices = @transform_1, window_bounds = array<i64: 4, 1, 16>}, {transform_indices = @transform_2, window_bounds = array<i64: 4, 1, 16>}, {transform_indices = @transform_3, window_bounds = array<i64: 4, 4, 48>}]} {
    %c0 = arith.constant 0 : index
    %c0_0 = arith.constant 0 : index
    %c0_1 = arith.constant 0 : index
    %0 = vector.load %arg1[%c0, %c0_0, %c0_1] : memref<4x4x48xf32, #tpu.memory_space<vmem>>, vector<4x4x48xf32>
    %c0_2 = arith.constant 0 : index
    %c0_3 = arith.constant 0 : index
    %c0_4 = arith.constant 0 : index
    %1 = vector.load %arg2[%c0_2, %c0_3, %c0_4] : memref<4x1x16xf32, #tpu.memory_space<vmem>>, vector<4x1x16xf32>
    %c0_5 = arith.constant 0 : index
    %c0_6 = arith.constant 0 : index
    %c0_7 = arith.constant 0 : index
    %2 = vector.load %arg3[%c0_5, %c0_6, %c0_7] : memref<4x1x16xf32, #tpu.memory_space<vmem>>, vector<4x1x16xf32>
    %3 = vector.extract_strided_slice %0 {offsets = [0, 0, 0], sizes = [4, 4, 16], strides = [1, 1, 1]} : vector<4x4x48xf32> to vector<4x4x16xf32>
    %4 = vector.extract_strided_slice %0 {offsets = [0, 0, 16], sizes = [4, 4, 16], strides = [1, 1, 1]} : vector<4x4x48xf32> to vector<4x4x16xf32>
    %5 = vector.broadcast %1 : vector<4x1x16xf32> to vector<4x4x16xf32>
    %6 = arith.mulf %3, %5 : vector<4x4x16xf32>
    %7 = vector.broadcast %2 : vector<4x1x16xf32> to vector<4x4x16xf32>
    %8 = arith.mulf %4, %7 : vector<4x4x16xf32>
    %9 = arith.subf %6, %8 : vector<4x4x16xf32>
    %c0_8 = arith.constant 0 : index
    %c0_9 = arith.constant 0 : index
    %c0_10 = arith.constant 0 : index
    %10 = vector.load %arg4[%c0_8, %c0_9, %c0_10] : memref<4x4x48xf32, #tpu.memory_space<vmem>>, vector<4x4x16xf32>
    tpu.vector_store %arg4[%c0_8, %c0_9, %c0_10], %9 {strides = array<i32>} : memref<4x4x48xf32, #tpu.memory_space<vmem>>, vector<4x4x16xf32>,
    %11 = vector.broadcast %1 : vector<4x1x16xf32> to vector<4x4x16xf32>
    %12 = arith.mulf %4, %11 : vector<4x4x16xf32>
    %13 = vector.broadcast %2 : vector<4x1x16xf32> to vector<4x4x16xf32>
    %14 = arith.mulf %3, %13 : vector<4x4x16xf32>
    %15 = arith.addf %12, %14 : vector<4x4x16xf32>
    %c0_11 = arith.constant 0 : index
    %c0_12 = arith.constant 0 : index
    %c16 = arith.constant 16 : index
    %16 = vector.load %arg4[%c0_11, %c0_12, %c16] : memref<4x4x48xf32, #tpu.memory_space<vmem>>, vector<4x4x16xf32>
    tpu.vector_store %arg4[%c0_11, %c0_12, %c16], %15 {strides = array<i32>} : memref<4x4x48xf32, #tpu.memory_space<vmem>>, vector<4x4x16xf32>,
    %17 = vector.extract_strided_slice %0 {offsets = [0, 0, 32], sizes = [4, 4, 16], strides = [1, 1, 1]} : vector<4x4x48xf32> to vector<4x4x16xf32>
    %c0_13 = arith.constant 0 : index
    %c0_14 = arith.constant 0 : index
    %c32 = arith.constant 32 : index
    %18 = vector.load %arg4[%c0_13, %c0_14, %c32] : memref<4x4x48xf32, #tpu.memory_space<vmem>>, vector<4x4x16xf32>
    tpu.vector_store %arg4[%c0_13, %c0_14, %c32], %17 {strides = array<i32>} : memref<4x4x48xf32, #tpu.memory_space<vmem>>, vector<4x4x16xf32>,
    return
  }
  func.func @transform_0(%arg0: i32) -> (i32, i32, i32) {
    %c0_i32 = arith.constant 0 : i32
    %c0_i32_0 = arith.constant 0 : i32
    %c0_i32_1 = arith.constant 0 : i32
    return %arg0, %c0_i32, %c0_i32_0 : i32, i32, i32
  }
  func.func @transform_1(%arg0: i32) -> (i32, i32, i32) {
    %c0_i32 = arith.constant 0 : i32
    %c0_i32_0 = arith.constant 0 : i32
    %c0_i32_1 = arith.constant 0 : i32
    return %arg0, %c0_i32, %c0_i32_0 : i32, i32, i32
  }
  func.func @transform_2(%arg0: i32) -> (i32, i32, i32) {
    %c0_i32 = arith.constant 0 : i32
    %c0_i32_0 = arith.constant 0 : i32
    %c0_i32_1 = arith.constant 0 : i32
    return %arg0, %c0_i32, %c0_i32_0 : i32, i32, i32
  }
  func.func @transform_3(%arg0: i32) -> (i32, i32, i32) {
    %c0_i32 = arith.constant 0 : i32
    %c0_i32_0 = arith.constant 0 : i32
    %c0_i32_1 = arith.constant 0 : i32
    return %arg0, %c0_i32, %c0_i32_0 : i32, i32, i32
  }
}

</mosaic_0001>

<llo_original>
// kernel: tpu_custom_call.1
$region0: #{tpu_custom_call.1}
  #allocation0 [shape = 'u32[]', space=smem, size = 0x4, offset = 0x4, fixed_abs, tag = 'smem constant byte address 0x4 - core index']
  #allocation1 [shape = 'u32[144,128]{1,0:T(1,128)}', space=vmem, size = 0x12000, scoped, tag = 'internal scratch']
  %s0 = inlined_call_operand.hbm [shape: f32[8,4,48], index: 0, kind: input, shape index: {}]
  %s1 = inlined_call_operand.hbm [shape: f32[8,1,16], index: 1, kind: input, shape index: {}]
  %s2 = inlined_call_operand.hbm [shape: f32[8,1,16], index: 2, kind: input, shape index: {}]
  %s3 = inlined_call_operand.hbm [shape: f32[8,4,48], index: 3, kind: output, shape index: {}]
  %s4 = sld [smem:[#allocation0]]
  $region57: #{tpu_custom_call.1} parent=0
    _
  %s6 = ssub.s32 1, %s4
  %s7 = scalar_select 0, %s6, %s4
  $region1: #{tpu_custom_call.1} parent=0
    #allocation2 [shape = 'u8[16384]{0}', space=vmem, size = 0x4000, scoped, tag = 'input window, operand 0']
    #allocation3 [shape = 's32[2]{0}', space=sflag, size = 0x8, scoped, tag = 'scoped memory for tpu_custom_call.1']
    #allocation4 [shape = 's32[2]{0}', space=sflag, size = 0x8, scoped, tag = 'scoped memory for tpu_custom_call.1']
    #allocation5 [shape = 'u8[4096]{0}', space=vmem, size = 0x1000, scoped, tag = 'input window, operand 1']
    #allocation6 [shape = 's32[2]{0}', space=sflag, size = 0x8, scoped, tag = 'scoped memory for tpu_custom_call.1']
    #allocation7 [shape = 'u8[4096]{0}', space=vmem, size = 0x1000, scoped, tag = 'input window, operand 2']
    #allocation8 [shape = 'u8[16384]{0}', space=vmem, size = 0x4000, scoped, tag = 'output window, operand 0']
    %8 = vsyncpa [#allocation3], 0
    %s9 = scalar_lea.sflag [#allocation3], 1
    %10 = vsyncpa %s9, 0
    %11 = vsyncpa [#allocation6], 0
    %s12 = scalar_lea.sflag [#allocation6], 1
    %13 = vsyncpa %s12, 0
    %14 = vsyncpa [#allocation4], 0
    %s15 = scalar_lea.sflag [#allocation4], 1
    %16 = vsyncpa %s15, 0
    loop: start=0, step=1, limit=4
    $region2: #{tpu_custom_call.1} parent=1 // loop_pre_header
      _
    $region3: #{tpu_custom_call.1} parent=1 // loop_header
      %s18 = sphi 0, %s22
      %p19 = scmp.ge.s32.totalorder %s18, 4
      %s28 = sphi 0, %s30
      %s31 = sphi 0, %s28
      %s32 = sphi 0, %s31
      %s48 = sphi 0, %s32
      %s54 = sphi 0, %s56
      %s57 = sphi 0, %s54
      %s58 = sphi 0, %s57
      %s74 = sphi 0, %s58
      %s80 = sphi 0, %s82
      %s83 = sphi 0, %s80
      %s84 = sphi 0, %s83
      %s100 = sphi 0, %s84
      %s106 = sphi 0, %s108
      %s109 = sphi 0, %s106
      %s110 = sphi 0, %s109
      %s126 = sphi 0, %s110
    $region4: #{tpu_custom_call.1} parent=1 // loop_header_branch
      %21 = sbr.rel (%p19) target = $region8
    $region5: #{tpu_custom_call.1} parent=1 // loop_body
      %s23 = ssub.s32 %s18, 1
      %s24 = ssub.s32 %s18, 2
      %s25 = sadd.s32 %s18, 1
      %s26 = ssub.s32 %s18, %s25
      %p27 = scmp.eq.s32.totalorder %s26, 0
      %s29 = sadd.s32 %s28, 1
      %s30 = scalar_select %p27, %s28, %s29
      %p33 = pneg %p27
      %p34 = scmp.eq.s32.totalorder %s18, 1
      %p35 = por %p33, %p34
      %p36 = scmp.ne.s32.totalorder %s28, %s31
      %p37 = scmp.eq.s32.totalorder %s18, 0
      %p38 = por %p36, %p37
      %p39 = scmp.ne.s32.totalorder %s28, %s31
      %p40 = scmp.eq.s32.totalorder %s23, 1
      %p41 = por %p39, %p40
      %p42 = scmp.ne.s32.totalorder %s31, %s32
      %p43 = scmp.eq.s32.totalorder %s23, 0
      %p44 = por %p42, %p43
      %p45 = scmp.ne.s32.totalorder %s31, %s32
      %p46 = scmp.eq.s32.totalorder %s24, 1
      %p47 = por %p45, %p46
      %p49 = scmp.ne.s32.totalorder %s32, %s48
      %p50 = scmp.eq.s32.totalorder %s24, 0
      %p51 = por %p49, %p50
      %s52 = ssub.s32 %s18, %s25
      %p53 = scmp.eq.s32.totalorder %s52, 0
      %s55 = sadd.s32 %s54, 1
      %s56 = scalar_select %p53, %s54, %s55
      %p59 = pneg %p53
      %p60 = scmp.eq.s32.totalorder %s18, 1
      %p61 = por %p59, %p60
      %p62 = scmp.ne.s32.totalorder %s54, %s57
      %p63 = scmp.eq.s32.totalorder %s18, 0
      %p64 = por %p62, %p63
      %p65 = scmp.ne.s32.totalorder %s54, %s57
      %p66 = scmp.eq.s32.totalorder %s23, 1
      %p67 = por %p65, %p66
      %p68 = scmp.ne.s32.totalorder %s57, %s58
      %p69 = scmp.eq.s32.totalorder %s23, 0
      %p70 = por %p68, %p69
      %p71 = scmp.ne.s32.totalorder %s57, %s58
      %p72 = scmp.eq.s32.totalorder %s24, 1
      %p73 = por %p71, %p72
      %p75 = scmp.ne.s32.totalorder %s58, %s74
      %p76 = scmp.eq.s32.totalorder %s24, 0
      %p77 = por %p75, %p76
      %s78 = ssub.s32 %s18, %s25
      %p79 = scmp.eq.s32.totalorder %s78, 0
      %s81 = sadd.s32 %s80, 1
      %s82 = scalar_select %p79, %s80, %s81
      %p85 = pneg %p79
      %p86 = scmp.eq.s32.totalorder %s18, 1
      %p87 = por %p85, %p86
      %p88 = scmp.ne.s32.totalorder %s80, %s83
      %p89 = scmp.eq.s32.totalorder %s18, 0
      %p90 = por %p88, %p89
      %p91 = scmp.ne.s32.totalorder %s80, %s83
      %p92 = scmp.eq.s32.totalorder %s23, 1
      %p93 = por %p91, %p92
      %p94 = scmp.ne.s32.totalorder %s83, %s84
      %p95 = scmp.eq.s32.totalorder %s23, 0
      %p96 = por %p94, %p95
      %p97 = scmp.ne.s32.totalorder %s83, %s84
      %p98 = scmp.eq.s32.totalorder %s24, 1
      %p99 = por %p97, %p98
      %p101 = scmp.ne.s32.totalorder %s84, %s100
      %p102 = scmp.eq.s32.totalorder %s24, 0
      %p103 = por %p101, %p102
      %s104 = ssub.s32 %s18, %s25
      %p105 = scmp.eq.s32.totalorder %s104, 0
      %s107 = sadd.s32 %s106, 1
      %s108 = scalar_select %p105, %s106, %s107
      %p111 = pneg %p105
      %p112 = scmp.eq.s32.totalorder %s18, 1
      %p113 = por %p111, %p112
      %p114 = scmp.ne.s32.totalorder %s106, %s109
      %p115 = scmp.eq.s32.totalorder %s18, 0
      %p116 = por %p114, %p115
      %p117 = scmp.ne.s32.totalorder %s106, %s109
      %p118 = scmp.eq.s32.totalorder %s23, 1
      %p119 = por %p117, %p118
      %p120 = scmp.ne.s32.totalorder %s109, %s110
      %p121 = scmp.eq.s32.totalorder %s23, 0
      %p122 = por %p120, %p121
      %p123 = scmp.ne.s32.totalorder %s109, %s110
      %p124 = scmp.eq.s32.totalorder %s24, 1
      %p125 = por %p123, %p124
      %p127 = scmp.ne.s32.totalorder %s110, %s126
      %p128 = scmp.eq.s32.totalorder %s24, 0
      %p129 = por %p127, %p128
      %p130 = scmp.le.s32.totalorder 1, %s18
      %p131 = scmp.lt.s32.totalorder %s18, 3
      %p132 = pnand %p130, %p131
      %p133 = pneg %p132
      // Predicated region
      $region9: #{tpu_custom_call.1} parent=5 // pred_check
        _
      $region10: #{tpu_custom_call.1} parent=5 // pred_check_branch
        %135 = sbr.rel (%p132) target = $region12
      $region11: #{tpu_custom_call.1} parent=5 // pred_region
        %s136 = ssub.s32 %s18, 1
      $region12: #{tpu_custom_call.1} parent=5 // pred_fallthru
        _
      %p137 = scmp.lt.s32.totalorder %s18, 2
      // Predicated region
      $region13: #{tpu_custom_call.1} parent=5 // pred_check
        %p138 = pneg %p137
      $region14: #{tpu_custom_call.1} parent=5 // pred_check_branch
        %140 = sbr.rel (%p138) target = $region16
      $region15: #{tpu_custom_call.1} parent=5 // pred_region
        // Predicated region
        $region17: #{tpu_custom_call.1} parent=15 // pred_check
          %p141 = pneg %p38
        $region18: #{tpu_custom_call.1} parent=15 // pred_check_branch
          %143 = sbr.rel (%p141) target = $region20
        $region19: #{tpu_custom_call.1} parent=15 // pred_region
          %s144 = sand.u32 %s28, 1
          %s145 = scalar_lea.sflag [#allocation3], %s144
          %s146 = sand.u32 %s28, 1
          %s147 = smul.addr %s146, 16
          %s148 = scalar_lea.vmem [#allocation2], %s147
          %s149 = smul.u32 4, %s18
          %s151 = ssub.s32 256, 256
          %152 = vsyncadd %s145, %s151
          %s153 = smul.addr %s149, 64
          %s154 = scalar_lea.hbm %s0, %s153
          %s155 = sshll.u32 %s148, 4
          %s156 = int_to_ptr.vmem [resolvable:$true] %s155
          %161 = dma.hbm_to_vmem [thread:$0]  %s154, 256, %s156, %s145, 64, 64, 4
        $region20: #{tpu_custom_call.1} parent=15 // pred_fallthru
          _
        // Predicated region
        $region21: #{tpu_custom_call.1} parent=15 // pred_check
          %p162 = pneg %p64
        $region22: #{tpu_custom_call.1} parent=15 // pred_check_branch
          %164 = sbr.rel (%p162) target = $region24
        $region23: #{tpu_custom_call.1} parent=15 // pred_region
          %s165 = sand.u32 %s18, 1
          %s166 = scalar_lea.sflag [#allocation6], %s165
          %s167 = sand.u32 %s54, 1
          %s168 = smul.addr %s167, 4
          %s169 = scalar_lea.vmem [#allocation5], %s168
          %s170 = smul.u32 4, %s18
          %s172 = ssub.s32 64, 64
          %173 = vsyncadd %s166, %s172
          %s174 = smul.addr %s170, 16
          %s175 = scalar_lea.hbm %s1, %s174
          %s176 = sshll.u32 %s169, 4
          %s177 = int_to_ptr.vmem [resolvable:$true] %s176
          %182 = dma.hbm_to_vmem [thread:$0]  %s175, 64, %s177, %s166, 16, 16, 1
        $region24: #{tpu_custom_call.1} parent=15 // pred_fallthru
          _
        // Predicated region
        $region25: #{tpu_custom_call.1} parent=15 // pred_check
          %p183 = pneg %p90
        $region26: #{tpu_custom_call.1} parent=15 // pred_check_branch
          %185 = sbr.rel (%p183) target = $region28
        $region27: #{tpu_custom_call.1} parent=15 // pred_region
          %s186 = sand.u32 %s18, 1
          %s187 = scalar_lea.sflag [#allocation6], %s186
          %s188 = sand.u32 %s80, 1
          %s189 = smul.addr %s188, 4
          %s190 = scalar_lea.vmem [#allocation7], %s189
          %s191 = smul.u32 4, %s18
          %s193 = ssub.s32 64, 64
          %194 = vsyncadd %s187, %s193
          %s195 = smul.addr %s191, 16
          %s196 = scalar_lea.hbm %s2, %s195
          %s197 = sshll.u32 %s190, 4
          %s198 = int_to_ptr.vmem [resolvable:$true] %s197
          %203 = dma.hbm_to_vmem [thread:$0]  %s196, 64, %s198, %s187, 16, 16, 1
        $region28: #{tpu_custom_call.1} parent=15 // pred_fallthru
          _
      $region16: #{tpu_custom_call.1} parent=5 // pred_fallthru
        _
      %p204 = scmp.le.s32.totalorder 1, %s18
      %p205 = scmp.lt.s32.totalorder %s18, 3
      %p206 = pnand %p204, %p205
      %p207 = pneg %p206
      // Predicated region
      $region29: #{tpu_custom_call.1} parent=5 // pred_check
        _
      $region30: #{tpu_custom_call.1} parent=5 // pred_check_branch
        %209 = sbr.rel (%p206) target = $region32
      $region31: #{tpu_custom_call.1} parent=5 // pred_region
        %s210 = ssub.s32 %s18, 1
        %s211 = sand.u32 %s31, 1
        %s212 = scalar_lea.sflag [#allocation3], %s211
        %s213 = sand.u32 %s31, 1
        %s214 = smul.addr %s213, 16
        %s215 = scalar_lea.vmem [#allocation2], %s214
        // Predicated region
        $region33: #{tpu_custom_call.1} parent=31 // pred_check
          %p216 = pneg %p44
        $region34: #{tpu_custom_call.1} parent=31 // pred_check_branch
          %218 = sbr.rel (%p216) target = $region36
        $region35: #{tpu_custom_call.1} parent=31 // pred_region
          %219 = dma.done %s212, 256
        $region36: #{tpu_custom_call.1} parent=31 // pred_fallthru
          _
        %s220 = sand.u32 %s23, 1
        %s221 = scalar_lea.sflag [#allocation6], %s220
        %s222 = sand.u32 %s57, 1
        %s223 = smul.addr %s222, 4
        %s224 = scalar_lea.vmem [#allocation5], %s223
        // Predicated region
        $region37: #{tpu_custom_call.1} parent=31 // pred_check
          %p225 = pneg %p70
        $region38: #{tpu_custom_call.1} parent=31 // pred_check_branch
          %227 = sbr.rel (%p225) target = $region40
        $region39: #{tpu_custom_call.1} parent=31 // pred_region
          %228 = dma.done %s221, 64
        $region40: #{tpu_custom_call.1} parent=31 // pred_fallthru
          _
        %s229 = sand.u32 %s23, 1
        %s230 = scalar_lea.sflag [#allocation6], %s229
        %s231 = sand.u32 %s83, 1
        %s232 = smul.addr %s231, 4
        %s233 = scalar_lea.vmem [#allocation7], %s232
        // Predicated region
        $region41: #{tpu_custom_call.1} parent=31 // pred_check
          %p234 = pneg %p96
        $region42: #{tpu_custom_call.1} parent=31 // pred_check_branch
          %236 = sbr.rel (%p234) target = $region44
        $region43: #{tpu_custom_call.1} parent=31 // pred_region
          %237 = dma.done %s230, 64
        $region44: #{tpu_custom_call.1} parent=31 // pred_fallthru
          _
        %s238 = sand.u32 %s31, 1
        %s239 = scalar_lea.sflag [#allocation3], %s238
        %s240 = sand.u32 %s31, 1
        %s241 = smul.addr %s240, 16
        %s242 = scalar_lea.vmem [#allocation2], %s241
        %p243 = pneg %p44
        %p244 = pneg %p41
        %s245 = sand.u32 %s23, 1
        %s246 = scalar_lea.sflag [#allocation6], %s245
        %s247 = sand.u32 %s57, 1
        %s248 = smul.addr %s247, 4
        %s249 = scalar_lea.vmem [#allocation5], %s248
        %p250 = pneg %p70
        %p251 = pneg %p67
        %s252 = sand.u32 %s23, 1
        %s253 = scalar_lea.sflag [#allocation6], %s252
        %s254 = sand.u32 %s83, 1
        %s255 = smul.addr %s254, 4
        %s256 = scalar_lea.vmem [#allocation7], %s255
        %p257 = pneg %p96
        %p258 = pneg %p93
        %p259 = pneg %p122
        %p260 = pneg %p119
        %s261 = sand.u32 %s109, 1
        %s262 = scalar_lea.sflag [#allocation4], %s261
        %s263 = sand.u32 %s109, 1
        %s264 = smul.addr %s263, 16
        %s265 = scalar_lea.vmem [#allocation8], %s264
        %s266 = smul.u32 4, %s23
        %s267 = smul.u32 4, %s23
        %s268 = smul.u32 4, %s23
        %s269 = smul.u32 4, %s23
        %v270 = vld [vmem:[%s215] sm:$0xf]
        %v271 = vld [vmem:[%s215 + $0x4] sm:$0xf]
        %v272 = vld [vmem:[%s215 + $0x8] sm:$0xf]
        %v273 = vld [vmem:[%s215 + $0xc] sm:$0xf]
        %v274 = vld [vmem:[%s224] sm:$0x1]
        %v275 = vld [vmem:[%s224 + $0x1] sm:$0x1]
        %v276 = vld [vmem:[%s224 + $0x2] sm:$0x1]
        %v277 = vld [vmem:[%s224 + $0x3] sm:$0x1]
        %v278 = vld [vmem:[%s233] sm:$0x1]
        %v279 = vld [vmem:[%s233 + $0x1] sm:$0x1]
        %v280 = vld [vmem:[%s233 + $0x2] sm:$0x1]
        %v281 = vld [vmem:[%s233 + $0x3] sm:$0x1]
        %v286 = vlaneseq
        %v287 = vshrl.u32 %v286, 7
        %v288 = vsub.s32 0, %v287
        %v289 = vrot.slane %v274, %v288
        %v290 = vlaneseq
        %v291 = vshrl.u32 %v290, 7
        %v292 = vsub.s32 0, %v291
        %v293 = vrot.slane %v275, %v292
        %v294 = vlaneseq
        %v295 = vshrl.u32 %v294, 7
        %v296 = vsub.s32 0, %v295
        %v297 = vrot.slane %v276, %v296
        %v298 = vlaneseq
        %v299 = vshrl.u32 %v298, 7
        %v300 = vsub.s32 0, %v299
        %v301 = vrot.slane %v277, %v300
        %v306 = vmul.f32 %v270, %v289
        %v307 = vmul.f32 %v271, %v293
        %v308 = vmul.f32 %v272, %v297
        %v309 = vmul.f32 %v273, %v301
        %v314 = vlaneseq
        %v315 = vshrl.u32 %v314, 7
        %v316 = vsub.s32 0, %v315
        %v317 = vrot.slane %v278, %v316
        %v318 = vlaneseq
        %v319 = vshrl.u32 %v318, 7
        %v320 = vsub.s32 0, %v319
        %v321 = vrot.slane %v279, %v320
        %v322 = vlaneseq
        %v323 = vshrl.u32 %v322, 7
        %v324 = vsub.s32 0, %v323
        %v325 = vrot.slane %v280, %v324
        %v326 = vlaneseq
        %v327 = vshrl.u32 %v326, 7
        %v328 = vsub.s32 0, %v327
        %v329 = vrot.slane %v281, %v328
        %334 = vrot.lane.b32.xlu0 %v317, 16
        %v335 = vpop.permute.xlu0 %334
        %336 = vrot.lane.b32.xlu0 %v321, 16
        %v337 = vpop.permute.xlu0 %336
        %338 = vrot.lane.b32.xlu0 %v325, 16
        %v339 = vpop.permute.xlu0 %338
        %340 = vrot.lane.b32.xlu0 %v329, 16
        %v341 = vpop.permute.xlu0 %340
        %v346 = vmul.f32 %v270, %v335
        %v347 = vmul.f32 %v271, %v337
        %v348 = vmul.f32 %v272, %v339
        %v349 = vmul.f32 %v273, %v341
        %354 = vrot.lane.b32.xlu0 %v346, 112
        %v355 = vpop.permute.xlu0 %354
        %356 = vrot.lane.b32.xlu0 %v347, 112
        %v357 = vpop.permute.xlu0 %356
        %358 = vrot.lane.b32.xlu0 %v348, 112
        %v359 = vpop.permute.xlu0 %358
        %360 = vrot.lane.b32.xlu0 %v349, 112
        %v361 = vpop.permute.xlu0 %360
        %v366 = vsub.f32 %v306, %v355
        %v367 = vsub.f32 %v307, %v357
        %v368 = vsub.f32 %v308, %v359
        %v369 = vsub.f32 %v309, %v361
        %vm370 = vcmask 125952
        %371 = vst.msk [vmem:[%s265] sm:$0xf] %vm370, %v366
        %372 = vst.msk [vmem:[%s265 + $0x4] sm:$0xf] %vm370, %v367
        %373 = vst.msk [vmem:[%s265 + $0x8] sm:$0xf] %vm370, %v368
        %374 = vst.msk [vmem:[%s265 + $0xc] sm:$0xf] %vm370, %v369
        %375 = vrot.lane.b32.xlu0 %v289, 16
        %v376 = vpop.permute.xlu0 %375
        %377 = vrot.lane.b32.xlu0 %v293, 16
        %v378 = vpop.permute.xlu0 %377
        %379 = vrot.lane.b32.xlu0 %v297, 16
        %v380 = vpop.permute.xlu0 %379
        %381 = vrot.lane.b32.xlu0 %v301, 16
        %v382 = vpop.permute.xlu0 %381
        %v387 = vmul.f32 %v270, %v376
        %v388 = vmul.f32 %v271, %v378
        %v389 = vmul.f32 %v272, %v380
        %v390 = vmul.f32 %v273, %v382
        %v391 = vmul.f32 %v270, %v317
        %v392 = vmul.f32 %v271, %v321
        %v393 = vmul.f32 %v272, %v325
        %v394 = vmul.f32 %v273, %v329
        %399 = vrot.lane.b32.xlu0 %v391, 16
        %v400 = vpop.permute.xlu0 %399
        %401 = vrot.lane.b32.xlu0 %v392, 16
        %v402 = vpop.permute.xlu0 %401
        %403 = vrot.lane.b32.xlu0 %v393, 16
        %v404 = vpop.permute.xlu0 %403
        %405 = vrot.lane.b32.xlu0 %v394, 16
        %v406 = vpop.permute.xlu0 %405
        %v411 = vadd.f32 %v387, %v400
        %v412 = vadd.f32 %v388, %v402
        %v413 = vadd.f32 %v389, %v404
        %v414 = vadd.f32 %v390, %v406
        %vm415 = vcmask 257152
        %416 = vst.msk [vmem:[%s265] sm:$0xf] %vm415, %v411
        %417 = vst.msk [vmem:[%s265 + $0x4] sm:$0xf] %vm415, %v412
        %418 = vst.msk [vmem:[%s265 + $0x8] sm:$0xf] %vm415, %v413
        %419 = vst.msk [vmem:[%s265 + $0xc] sm:$0xf] %vm415, %v414
        %vm420 = vcmask 388352
        %421 = vst.msk [vmem:[%s265] sm:$0xf] %vm420, %v270
        %422 = vst.msk [vmem:[%s265 + $0x4] sm:$0xf] %vm420, %v271
        %423 = vst.msk [vmem:[%s265 + $0x8] sm:$0xf] %vm420, %v272
        %424 = vst.msk [vmem:[%s265 + $0xc] sm:$0xf] %vm420, %v273
        %s425 = sand.u32 %s109, 1
        %s426 = scalar_lea.sflag [#allocation4], %s425
        %s427 = sand.u32 %s109, 1
        %s428 = smul.addr %s427, 16
        %s429 = scalar_lea.vmem [#allocation8], %s428
        // Predicated region
        $region45: #{tpu_custom_call.1} parent=31 // pred_check
          %p430 = pneg %p119
        $region46: #{tpu_custom_call.1} parent=31 // pred_check_branch
          %432 = sbr.rel (%p430) target = $region48
        $region47: #{tpu_custom_call.1} parent=31 // pred_region
          %s433 = smul.u32 4, %s23
          %s435 = ssub.s32 256, 256
          %436 = vsyncadd %s426, %s435
          %s437 = smul.addr %s433, 64
          %s438 = scalar_lea.hbm %s3, %s437
          %s439 = sshll.u32 %s429, 4
          %s440 = int_to_ptr.vmem [resolvable:$true] %s439
          %445 = dma.vmem_to_hbm [thread:$0]  %s440, 256, %s438, %s426, 64, 64, 4
        $region48: #{tpu_custom_call.1} parent=31 // pred_fallthru
          _
      $region32: #{tpu_custom_call.1} parent=5 // pred_fallthru
        _
      %p446 = scmp.le.s32.totalorder 2, %s18
      // Predicated region
      $region49: #{tpu_custom_call.1} parent=5 // pred_check
        %p447 = pneg %p446
      $region50: #{tpu_custom_call.1} parent=5 // pred_check_branch
        %449 = sbr.rel (%p447) target = $region52
      $region51: #{tpu_custom_call.1} parent=5 // pred_region
        %s450 = ssub.s32 %s18, 2
        // Predicated region
        $region53: #{tpu_custom_call.1} parent=51 // pred_check
          %p451 = pneg %p125
        $region54: #{tpu_custom_call.1} parent=51 // pred_check_branch
          %453 = sbr.rel (%p451) target = $region56
        $region55: #{tpu_custom_call.1} parent=51 // pred_region
          %s454 = sand.u32 %s110, 1
          %s455 = scalar_lea.sflag [#allocation4], %s454
          %s456 = sand.u32 %s110, 1
          %s457 = smul.addr %s456, 16
          %s458 = scalar_lea.vmem [#allocation8], %s457
          %459 = dma.done %s455, 256
        $region56: #{tpu_custom_call.1} parent=51 // pred_fallthru
          _
      $region52: #{tpu_custom_call.1} parent=5 // pred_fallthru
        _
    $region6: #{tpu_custom_call.1} parent=1 // loop_footer
      %s22 = sadd.s32 1, %s18
    $region7: #{tpu_custom_call.1} parent=1 // loop_footer_branch
      %17 = sbr.rel target = $region3
    $region8: #{tpu_custom_call.1} parent=1 // loop_exit
      _
    %460 = vsyncpa [#allocation3], 1
    %s461 = scalar_lea.sflag [#allocation3], 1
    %462 = vsyncpa %s461, 1
    %463 = vsyncpa [#allocation6], 1
    %s464 = scalar_lea.sflag [#allocation6], 1
    %465 = vsyncpa %s464, 1
    %466 = vsyncpa [#allocation4], 1
    %s467 = scalar_lea.sflag [#allocation4], 1
    %468 = vsyncpa %s467, 1

</llo_original>
